<compile_context>
chip_gen: v6e
topology: v6e:2x2x1
jax: 0.10.0
libtpu: 0.0.40
codegen_flags: <defaults>
</compile_context>

<pallas_src>
import functools
import math

import jax
import jax.numpy as jnp
from jax import lax
from jax.experimental import pallas as pl
from jax.experimental.pallas import tpu as pltpu


_LANES = 128
_TARGET_BLOCK_BYTES = 2 * 1024 * 1024   # ~2 MiB per input block; x2 buffers x2 (in+out) ~ 8 MiB
_VMEM_LIMIT_BYTES = 32 * 1024 * 1024    # explicit; safe on v5e/v6e (128 MiB) and v7x (64 MiB/TC)


def _cdiv(a, b):
    return (a + b - 1) // b


def _round_up(a, m):
    return _cdiv(a, m) * m


def _row_granule(dtype):
    # Sub-32-bit dtypes pack along sublanes (bf16 vreg = (16,128), int8 = (32,128));
    # keep the row tile a multiple of the packing so loads/stores stay unmasked.
    itemsize = jnp.dtype(dtype).itemsize
    return 8 * max(1, 4 // itemsize)


def _choose_tile(n_rows, row_bytes, granule):
    # Biggest block under the VMEM budget, but keep >= 2 grid steps when possible
    # so both TensorCores of a v7x chip get work on this mem-bound kernel.
    budget_tile = max(granule, (_TARGET_BLOCK_BYTES // max(row_bytes, 1)) // granule * granule)
    two_way = _round_up(_cdiv(n_rows, 2), granule)
    return min(budget_tile, max(granule, two_way))


def _precise_reciprocal(x):
    # EUP approximate reciprocal (separate VLIW slot from the VALU), refined with
    # two Newton-Raphson steps -> full f32 accuracy at negligible VPU cost.
    r = pl.reciprocal(x, approx=True)
    r = r * (2.0 - x * r)
    r = r * (2.0 - x * r)
    return r


def _finish(xc, denom, *, adanorm_scale):
    # Fused epilogue:  out = scale * t * (1 - 0.1 * t),  t = xc / denom.
    inv = _precise_reciprocal(denom)
    t = xc * inv
    c = float(adanorm_scale)
    return t * (c - (0.1 * c) * t)


def _adanorm_packed_kernel(seg_ref, x_ref, o_ref, *, hidden, eps, adanorm_scale):
    # x_ref: (tile, 128) block; the 128 lanes hold (128 // hidden) independent rows.
    # seg_ref: (128, 128) block-diagonal ones.  x @ seg broadcasts each segment's
    # sum back to every lane of that segment -> lane-dense segmented reduction on
    # the otherwise-idle MXU.
    x = x_ref[...].astype(jnp.float32)
    seg = seg_ref[...]

    seg_sum = jnp.dot(x, seg, precision=lax.Precision.HIGHEST,
                      preferred_element_type=jnp.float32)
    mean = seg_sum * (1.0 / hidden)
    xc = x - mean

    sq_sum = jnp.dot(xc * xc, seg, precision=lax.Precision.HIGHEST,
                     preferred_element_type=jnp.float32)
    std = jnp.sqrt(sq_sum * (1.0 / (hidden - 1)))        # unbiased, like torch.std

    out = _finish(xc, std + eps, adanorm_scale=adanorm_scale)
    o_ref[...] = out.astype(o_ref.dtype)


def _adanorm_rowwise_kernel(x_ref, o_ref, *, hidden, eps, adanorm_scale):
    # Fallback when hidden does not divide 128: (tile, hidden) blocks, last-axis
    # reductions per row.
    x = x_ref[...].astype(jnp.float32)
    mean = jnp.mean(x, axis=-1, keepdims=True)
    xc = x - mean
    var = jnp.sum(xc * xc, axis=-1, keepdims=True) * (1.0 / (hidden - 1))
    std = jnp.sqrt(var)
    out = _finish(xc, std + eps, adanorm_scale=adanorm_scale)
    o_ref[...] = out.astype(o_ref.dtype)


def adanorm(x, *, eps: float = 1e-5, adanorm_scale: float = 1.0):
    """AdaNorm forward over the last axis.  x: (..., hidden)."""
    orig_shape = x.shape
    hidden = int(orig_shape[-1])
    if hidden < 2:
        raise ValueError("AdaNorm forward needs hidden >= 2 (unbiased std).")
    rows = int(math.prod(orig_shape[:-1]))
    x2 = x.reshape(rows, hidden)
    granule = _row_granule(x.dtype)

    packed = hidden <= _LANES and _LANES % hidden == 0
    pack = (_LANES // hidden) if packed else 1
    width = _LANES if packed else hidden
    n_rows = _cdiv(rows, pack)                      # rows as presented to Pallas

    row_bytes = width * jnp.dtype(x.dtype).itemsize
    tile = _choose_tile(n_rows, row_bytes, granule)
    n_rows_pad = _round_up(n_rows, tile)
    rows_pad = n_rows_pad * pack
    grid = n_rows_pad // tile

    if rows_pad != rows:
        # Zero padding: padded rows stay finite (denom == eps) and are sliced off.
        x2 = jnp.pad(x2, ((0, rows_pad - rows), (0, 0)))

    compiler_params = pltpu.CompilerParams(
        dimension_semantics=("parallel",),
        vmem_limit_bytes=_VMEM_LIMIT_BYTES,
    )
    out_shape = jax.ShapeDtypeStruct((n_rows_pad, width), x.dtype)
    data_spec = pl.BlockSpec((tile, width), lambda i: (i, 0))

    if packed:
        xp = x2.reshape(n_rows_pad, width)          # free row-major reshape
        # Block-diagonal ones: lanes i, j belong to the same packed row iff
        # i // hidden == j // hidden.
        seg_id = jnp.arange(width, dtype=jnp.int32) // hidden
        seg = (seg_id[:, None] == seg_id[None, :]).astype(jnp.float32)

        kernel = functools.partial(_adanorm_packed_kernel, hidden=hidden,
                                   eps=float(eps), adanorm_scale=float(adanorm_scale))
        out = pl.pallas_call(
            kernel,
            out_shape=out_shape,
            grid_spec=pltpu.PrefetchScalarGridSpec(
                num_scalar_prefetch=0,
                grid=(grid,),
                in_specs=[pl.BlockSpec((width, width), lambda i: (0, 0)),
                          data_spec],
                out_specs=data_spec,
            ),
            compiler_params=compiler_params,
        )(seg, xp)
        out = out.reshape(rows_pad, hidden)
    else:
        kernel = functools.partial(_adanorm_rowwise_kernel, hidden=hidden,
                                   eps=float(eps), adanorm_scale=float(adanorm_scale))
        out = pl.pallas_call(
            kernel,
            out_shape=out_shape,
            grid_spec=pltpu.PrefetchScalarGridSpec(
                num_scalar_prefetch=0,
                grid=(grid,),
                in_specs=[data_spec],
                out_specs=data_spec,
            ),
            compiler_params=compiler_params,
        )(x2)

    if rows_pad != rows:
        out = out[:rows]
    return out.reshape(orig_shape)


def adanorm_reference(x, *, eps: float = 1e-5, adanorm_scale: float = 1.0):
    """Pure-JAX reference mirroring the PyTorch forward exactly (incl. mean2)."""
    x = x.astype(jnp.float32)
    n = x.shape[-1]
    mean = jnp.mean(x, axis=-1, keepdims=True)
    xc = x - mean
    std = jnp.sqrt(jnp.sum(xc * xc, axis=-1, keepdims=True) / (n - 1))
    mean2 = jnp.mean(xc, axis=-1, keepdims=True)
    gra = 0.1 * (xc - mean2) / (std + eps)
    return (xc - xc * gra) / (std + eps) * adanorm_scale


if __name__ == "__main__":
    # Module config: hidden=32, eps=1e-5, elementwise_affine=True, adanorm_scale=1.0
    hidden = 32
    eps = 1e-5
    adanorm_scale = 1.0

    # Parameters created by AdaNorm.__init__ (ones / zeros) but unused by forward().
    weight = jnp.ones((hidden,), dtype=jnp.float32)
    bias = jnp.zeros((hidden,), dtype=jnp.float32)

    fn = jax.jit(lambda v: adanorm(v, eps=eps, adanorm_scale=adanorm_scale))

    k1, k2, k3 = jax.random.split(jax.random.PRNGKey(0), 3)

    # 1) Shipped config (batch=2, seq=8, hidden=32) -> packed lane-dense path.
    x1 = jax.random.normal(k1, (2, 8, hidden), dtype=jnp.float32)
    o1 = jax.block_until_ready(fn(x1))
    r1 = adanorm_reference(x1, eps=eps, adanorm_scale=adanorm_scale)
    assert o1.shape == x1.shape
    assert jnp.allclose(o1, r1, atol=1e-5, rtol=1e-5), "mismatch (packed path)"

    # 2) Awkward row count -> exercises cdiv + zero padding and a multi-step grid.
    x2 = jax.random.normal(k2, (3, 37, hidden), dtype=jnp.float32)
    o2 = jax.block_until_ready(fn(x2))
    r2 = adanorm_reference(x2, eps=eps, adanorm_scale=adanorm_scale)
    assert o2.shape == x2.shape
    assert jnp.allclose(o2, r2, atol=1e-5, rtol=1e-5), "mismatch (padded path)"

    # 3) hidden that does not divide 128 -> row-wise fallback path.
    x3 = jax.random.normal(k3, (2, 8, 96), dtype=jnp.float32)
    o3 = jax.block_until_ready(fn(x3))
    r3 = adanorm_reference(x3, eps=eps, adanorm_scale=adanorm_scale)
    assert o3.shape == x3.shape
    assert jnp.allclose(o3, r3, atol=1e-5, rtol=1e-5), "mismatch (row-wise path)"

    print("KERNEL_OK")
</pallas_src>

<mosaic_0001>
module attributes {stable_mosaic.version = 11 : i64} {
  func.func @_adanorm_packed_kernel(%arg0: i32, %arg1: memref<128x128xf32, #tpu.memory_space<vmem>>, %arg2: memref<8x128xf32, #tpu.memory_space<vmem>>, %arg3: memref<8x128xf32, #tpu.memory_space<vmem>>) attributes {dimension_semantics = [#tpu.dimension_semantics<parallel>], iteration_bounds = array<i64: 1>, scalar_prefetch = 0 : i64, scratch_operands = 0 : i64, tpu.core_type = #tpu.core_type<tc>, window_params = [{pipeline_mode = #tpu.pipeline_mode<synchronous>, transform_indices = @transform_0, window_bounds = array<i64: 128, 128>}, {transform_indices = @transform_1, window_bounds = array<i64: 8, 128>}, {transform_indices = @transform_2, window_bounds = array<i64: 8, 128>}]} {
    %c0 = arith.constant 0 : index
    %c0_0 = arith.constant 0 : index
    %0 = vector.load %arg2[%c0, %c0_0] : memref<8x128xf32, #tpu.memory_space<vmem>>, vector<8x128xf32>
    %c0_1 = arith.constant 0 : index
    %c0_2 = arith.constant 0 : index
    %1 = vector.load %arg1[%c0_1, %c0_2] : memref<128x128xf32, #tpu.memory_space<vmem>>, vector<128x128xf32>
    %cst = arith.constant dense<0.000000e+00> : vector<8x128xf32>
    %2 = tpu.matmul %0, %1, %cst {dimension_numbers = #tpu.dot_dimension_numbers<[1], [0], [0], [1], [0, 0, 1, 1], [], []>, precision = #tpu.contract_precision<fp32>} : vector<8x128xf32>, vector<128x128xf32>, vector<8x128xf32> -> vector<8x128xf32>
    %cst_3 = arith.constant 3.125000e-02 : f32
    %3 = vector.broadcast %cst_3 : f32 to vector<8x128xf32>
    %4 = arith.mulf %2, %3 : vector<8x128xf32>
    %5 = arith.subf %0, %4 : vector<8x128xf32>
    %6 = arith.mulf %5, %5 : vector<8x128xf32>
    %cst_4 = arith.constant dense<0.000000e+00> : vector<8x128xf32>
    %7 = tpu.matmul %6, %1, %cst_4 {dimension_numbers = #tpu.dot_dimension_numbers<[1], [0], [0], [1], [0, 0, 1, 1], [], []>, precision = #tpu.contract_precision<fp32>} : vector<8x128xf32>, vector<128x128xf32>, vector<8x128xf32> -> vector<8x128xf32>
    %cst_5 = arith.constant 0.0322580636 : f32
    %8 = vector.broadcast %cst_5 : f32 to vector<8x128xf32>
    %9 = arith.mulf %7, %8 : vector<8x128xf32>
    %10 = math.sqrt %9 : vector<8x128xf32>
    %cst_6 = arith.constant 9.99999974E-6 : f32
    %11 = vector.broadcast %cst_6 : f32 to vector<8x128xf32>
    %12 = arith.addf %10, %11 : vector<8x128xf32>
    %13 = tpu.reciprocal %12 {approx = true} : vector<8x128xf32> -> vector<8x128xf32>
    %14 = arith.mulf %12, %13 : vector<8x128xf32>
    %cst_7 = arith.constant 2.000000e+00 : f32
    %15 = vector.broadcast %cst_7 : f32 to vector<8x128xf32>
    %16 = arith.subf %15, %14 : vector<8x128xf32>
    %17 = arith.mulf %13, %16 : vector<8x128xf32>
    %18 = arith.mulf %12, %17 : vector<8x128xf32>
    %cst_8 = arith.constant 2.000000e+00 : f32
    %19 = vector.broadcast %cst_8 : f32 to vector<8x128xf32>
    %20 = arith.subf %19, %18 : vector<8x128xf32>
    %21 = arith.mulf %17, %20 : vector<8x128xf32>
    %22 = arith.mulf %5, %21 : vector<8x128xf32>
    %cst_9 = arith.constant 1.000000e-01 : f32
    %23 = vector.broadcast %cst_9 : f32 to vector<8x128xf32>
    %24 = arith.mulf %23, %22 : vector<8x128xf32>
    %cst_10 = arith.constant 1.000000e+00 : f32
    %25 = vector.broadcast %cst_10 : f32 to vector<8x128xf32>
    %26 = arith.subf %25, %24 : vector<8x128xf32>
    %27 = arith.mulf %22, %26 : vector<8x128xf32>
    %c0_11 = arith.constant 0 : index
    %c0_12 = arith.constant 0 : index
    %28 = vector.load %arg3[%c0_11, %c0_12] : memref<8x128xf32, #tpu.memory_space<vmem>>, vector<8x128xf32>
    tpu.vector_store %arg3[%c0_11, %c0_12], %27 {strides = array<i32>} : memref<8x128xf32, #tpu.memory_space<vmem>>, vector<8x128xf32>,
    return
  }
  func.func @transform_0(%arg0: i32) -> (i32, i32) {
    %c0_i32 = arith.constant 0 : i32
    %c0_i32_0 = arith.constant 0 : i32
    %c0_i32_1 = arith.constant 0 : i32
    return %c0_i32, %c0_i32_0 : i32, i32
  }
  func.func @transform_1(%arg0: i32) -> (i32, i32) {
    %c0_i32 = arith.constant 0 : i32
    %c0_i32_0 = arith.constant 0 : i32
    return %arg0, %c0_i32 : i32, i32
  }
  func.func @transform_2(%arg0: i32) -> (i32, i32) {
    %c0_i32 = arith.constant 0 : i32
    %c0_i32_0 = arith.constant 0 : i32
    return %arg0, %c0_i32 : i32, i32
  }
}

</mosaic_0001>

<llo_original>
// kernel: _lambda_.1
$region0: #{_lambda_.1}
  #allocation0 [shape = 'u32[]', space=smem, size = 0x4, offset = 0x4, fixed_abs, tag = 'smem constant byte address 0x4 - core index']
  #allocation1 [shape = 'u32[144,128]{1,0:T(1,128)}', space=vmem, size = 0x12000, scoped, tag = 'internal scratch']
  %s0 = inlined_call_operand.vmem [shape: f32[128,128], index: 0, kind: input, shape index: {}]
  %s1 = inlined_call_operand.vmem [shape: f32[8,128], index: 1, kind: input, shape index: {}]
  %s2 = inlined_call_operand.vmem [shape: f32[8,128], index: 2, kind: output, shape index: {}]
  %s3 = sld [smem:[#allocation0]]
  $region18: #{_lambda_.1} parent=0
    _
  %s5 = ssub.s32 1, %s3
  %s6 = scalar_select 0, %s5, %s3
  // Predicated region
  $region2: #{_lambda_.1} parent=0 // pred_check
    _
  $region3: #{_lambda_.1} parent=0 // pred_check_branch
    %8 = sbr.rel (0) target = $region5
  $region4: #{_lambda_.1} parent=0 // pred_region
    _
  $region5: #{_lambda_.1} parent=0 // pred_fallthru
    _
  // Predicated region
  $region6: #{_lambda_.1} parent=0 // pred_check
    _
  $region7: #{_lambda_.1} parent=0 // pred_check_branch
    %10 = sbr.rel (0) target = $region9
  $region8: #{_lambda_.1} parent=0 // pred_region
    _
  $region9: #{_lambda_.1} parent=0 // pred_fallthru
    _
  %v11 = vld [vmem:[%s1] sm:$0xff]
  %v12 = vld [vmem:[%s0] sm:$0xff]
  %v13 = vld [vmem:[%s0 + $0x8] sm:$0xff]
  %v14 = vld [vmem:[%s0 + $0x10] sm:$0xff]
  %v15 = vld [vmem:[%s0 + $0x18] sm:$0xff]
  %v16 = vld [vmem:[%s0 + $0x20] sm:$0xff]
  %v17 = vld [vmem:[%s0 + $0x28] sm:$0xff]
  %v18 = vld [vmem:[%s0 + $0x30] sm:$0xff]
  %v19 = vld [vmem:[%s0 + $0x38] sm:$0xff]
  %v20 = vld [vmem:[%s0 + $0x40] sm:$0xff]
  %v21 = vld [vmem:[%s0 + $0x48] sm:$0xff]
  %v22 = vld [vmem:[%s0 + $0x50] sm:$0xff]
  %v23 = vld [vmem:[%s0 + $0x58] sm:$0xff]
  %v24 = vld [vmem:[%s0 + $0x60] sm:$0xff]
  %v25 = vld [vmem:[%s0 + $0x68] sm:$0xff]
  %v26 = vld [vmem:[%s0 + $0x70] sm:$0xff]
  %v27 = vld [vmem:[%s0 + $0x78] sm:$0xff]
  %28 = vmatprep.subr.mxu0 0.0
  %v29 = vand.u32 %v27, 4294901760
  %30 = vmatpush1.msra.mxu0 %v29
  %31 = vmatprep.subr.mxu0 0.0
  %v32 = vand.u32 %v26, 4294901760
  %33 = vmatpush1.msra.mxu0 %v32
  %34 = vmatprep.subr.mxu0 0.0
  %v35 = vand.u32 %v25, 4294901760
  %36 = vmatpush1.msra.mxu0 %v35
  %37 = vmatprep.subr.mxu0 0.0
  %v38 = vand.u32 %v24, 4294901760
  %39 = vmatpush1.msra.mxu0 %v38
  %40 = vmatprep.subr.mxu0 0.0
  %v41 = vand.u32 %v23, 4294901760
  %42 = vmatpush1.msra.mxu0 %v41
  %43 = vmatprep.subr.mxu0 0.0
  %v44 = vand.u32 %v22, 4294901760
  %45 = vmatpush1.msra.mxu0 %v44
  %46 = vmatprep.subr.mxu0 0.0
  %v47 = vand.u32 %v21, 4294901760
  %48 = vmatpush1.msra.mxu0 %v47
  %49 = vmatprep.subr.mxu0 0.0
  %v50 = vand.u32 %v20, 4294901760
  %51 = vmatpush1.msra.mxu0 %v50
  %52 = vmatprep.subr.mxu0 0.0
  %v53 = vand.u32 %v19, 4294901760
  %54 = vmatpush1.msra.mxu0 %v53
  %55 = vmatprep.subr.mxu0 0.0
  %v56 = vand.u32 %v18, 4294901760
  %57 = vmatpush1.msra.mxu0 %v56
  %58 = vmatprep.subr.mxu0 0.0
  %v59 = vand.u32 %v17, 4294901760
  %60 = vmatpush1.msra.mxu0 %v59
  %61 = vmatprep.subr.mxu0 0.0
  %v62 = vand.u32 %v16, 4294901760
  %63 = vmatpush1.msra.mxu0 %v62
  %64 = vmatprep.subr.mxu0 0.0
  %v65 = vand.u32 %v15, 4294901760
  %66 = vmatpush1.msra.mxu0 %v65
  %67 = vmatprep.subr.mxu0 0.0
  %v68 = vand.u32 %v14, 4294901760
  %69 = vmatpush1.msra.mxu0 %v68
  %70 = vmatprep.subr.mxu0 0.0
  %v71 = vand.u32 %v13, 4294901760
  %72 = vmatpush1.msra.mxu0 %v71
  %73 = vmatprep.subr.mxu0 0.0
  %v74 = vand.u32 %v12, 4294901760
  %75 = vmatpush1.msra.mxu0 %v74
  %76 = vmatprep.subr.mxu0 0.0
  %77 = vmatpush2.msra.mxu0 0.0
  %78 = vmatprep.subr.mxu0 0.0
  %79 = vmatpush2.msra.mxu0 0.0
  %80 = vmatprep.subr.mxu0 0.0
  %81 = vmatpush2.msra.mxu0 0.0
  %82 = vmatprep.subr.mxu0 0.0
  %83 = vmatpush2.msra.mxu0 0.0
  %84 = vmatprep.subr.mxu0 0.0
  %85 = vmatpush2.msra.mxu0 0.0
  %86 = vmatprep.subr.mxu0 0.0
  %87 = vmatpush2.msra.mxu0 0.0
  %88 = vmatprep.subr.mxu0 0.0
  %89 = vmatpush2.msra.mxu0 0.0
  %90 = vmatprep.subr.mxu0 0.0
  %91 = vmatpush2.msra.mxu0 0.0
  %92 = vmatprep.subr.mxu0 0.0
  %93 = vmatpush2.msra.mxu0 0.0
  %94 = vmatprep.subr.mxu0 0.0
  %95 = vmatpush2.msra.mxu0 0.0
  %96 = vmatprep.subr.mxu0 0.0
  %97 = vmatpush2.msra.mxu0 0.0
  %98 = vmatprep.subr.mxu0 0.0
  %99 = vmatpush2.msra.mxu0 0.0
  %100 = vmatprep.subr.mxu0 0.0
  %101 = vmatpush2.msra.mxu0 0.0
  %102 = vmatprep.subr.mxu0 0.0
  %103 = vmatpush2.msra.mxu0 0.0
  %104 = vmatprep.subr.mxu0 0.0
  %105 = vmatpush2.msra.mxu0 0.0
  %106 = vmatprep.subr.mxu0 0.0
  %107 = vmatpush2.msra.mxu0 0.0
  %108 = vmatprep.mubr.f32.mxu0 0.0
  %v109 = vand.u32 %v11, 4294901760
  %v110 = vsub.f32 %v11, %v109
  %v111 = vand.u32 %v110, 4294901760
  %v112 = vsub.f32 %v110, %v111
  %v113 = vand.u32 %v112, 4294901760
  %114 = vmatmul.mubr.f32.gmra.mxu0 %v113
  %v115 = vpop.f32.mrf.mxu0
  %v116 = vadd.f32 0.0, %v115
  %v117 = vpop.f32.mrf.mxu0
  %118 = vdwg.mxu0
  %119 = vmatprep.subr.mxu0 0.0
  %v120 = vand.u32 %v27, 4294901760
  %v121 = vsub.f32 %v27, %v120
  %v122 = vand.u32 %v121, 4294901760
  %v123 = vsub.f32 %v121, %v122
  %v124 = vand.u32 %v123, 4294901760
  %125 = vmatpush1.msra.mxu0 %v124
  %126 = vmatprep.subr.mxu0 0.0
  %v127 = vand.u32 %v26, 4294901760
  %v128 = vsub.f32 %v26, %v127
  %v129 = vand.u32 %v128, 4294901760
  %v130 = vsub.f32 %v128, %v129
  %v131 = vand.u32 %v130, 4294901760
  %132 = vmatpush1.msra.mxu0 %v131
  %133 = vmatprep.subr.mxu0 0.0
  %v134 = vand.u32 %v25, 4294901760
  %v135 = vsub.f32 %v25, %v134
  %v136 = vand.u32 %v135, 4294901760
  %v137 = vsub.f32 %v135, %v136
  %v138 = vand.u32 %v137, 4294901760
  %139 = vmatpush1.msra.mxu0 %v138
  %140 = vmatprep.subr.mxu0 0.0
  %v141 = vand.u32 %v24, 4294901760
  %v142 = vsub.f32 %v24, %v141
  %v143 = vand.u32 %v142, 4294901760
  %v144 = vsub.f32 %v142, %v143
  %v145 = vand.u32 %v144, 4294901760
  %146 = vmatpush1.msra.mxu0 %v145
  %147 = vmatprep.subr.mxu0 0.0
  %v148 = vand.u32 %v23, 4294901760
  %v149 = vsub.f32 %v23, %v148
  %v150 = vand.u32 %v149, 4294901760
  %v151 = vsub.f32 %v149, %v150
  %v152 = vand.u32 %v151, 4294901760
  %153 = vmatpush1.msra.mxu0 %v152
  %154 = vmatprep.subr.mxu0 0.0
  %v155 = vand.u32 %v22, 4294901760
  %v156 = vsub.f32 %v22, %v155
  %v157 = vand.u32 %v156, 4294901760
  %v158 = vsub.f32 %v156, %v157
  %v159 = vand.u32 %v158, 4294901760
  %160 = vmatpush1.msra.mxu0 %v159
  %161 = vmatprep.subr.mxu0 0.0
  %v162 = vand.u32 %v21, 4294901760
  %v163 = vsub.f32 %v21, %v162
  %v164 = vand.u32 %v163, 4294901760
  %v165 = vsub.f32 %v163, %v164
  %v166 = vand.u32 %v165, 4294901760
  %167 = vmatpush1.msra.mxu0 %v166
  %168 = vmatprep.subr.mxu0 0.0
  %v169 = vand.u32 %v20, 4294901760
  %v170 = vsub.f32 %v20, %v169
  %v171 = vand.u32 %v170, 4294901760
  %v172 = vsub.f32 %v170, %v171
  %v173 = vand.u32 %v172, 4294901760
  %174 = vmatpush1.msra.mxu0 %v173
  %175 = vmatprep.subr.mxu0 0.0
  %v176 = vand.u32 %v19, 4294901760
  %v177 = vsub.f32 %v19, %v176
  %v178 = vand.u32 %v177, 4294901760
  %v179 = vsub.f32 %v177, %v178
  %v180 = vand.u32 %v179, 4294901760
  %181 = vmatpush1.msra.mxu0 %v180
  %182 = vmatprep.subr.mxu0 0.0
  %v183 = vand.u32 %v18, 4294901760
  %v184 = vsub.f32 %v18, %v183
  %v185 = vand.u32 %v184, 4294901760
  %v186 = vsub.f32 %v184, %v185
  %v187 = vand.u32 %v186, 4294901760
  %188 = vmatpush1.msra.mxu0 %v187
  %189 = vmatprep.subr.mxu0 0.0
  %v190 = vand.u32 %v17, 4294901760
  %v191 = vsub.f32 %v17, %v190
  %v192 = vand.u32 %v191, 4294901760
  %v193 = vsub.f32 %v191, %v192
  %v194 = vand.u32 %v193, 4294901760
  %195 = vmatpush1.msra.mxu0 %v194
  %196 = vmatprep.subr.mxu0 0.0
  %v197 = vand.u32 %v16, 4294901760
  %v198 = vsub.f32 %v16, %v197
  %v199 = vand.u32 %v198, 4294901760
  %v200 = vsub.f32 %v198, %v199
  %v201 = vand.u32 %v200, 4294901760
  %202 = vmatpush1.msra.mxu0 %v201
  %203 = vmatprep.subr.mxu0 0.0
  %v204 = vand.u32 %v15, 4294901760
  %v205 = vsub.f32 %v15, %v204
  %v206 = vand.u32 %v205, 4294901760
  %v207 = vsub.f32 %v205, %v206
  %v208 = vand.u32 %v207, 4294901760
  %209 = vmatpush1.msra.mxu0 %v208
  %210 = vmatprep.subr.mxu0 0.0
  %v211 = vand.u32 %v14, 4294901760
  %v212 = vsub.f32 %v14, %v211
  %v213 = vand.u32 %v212, 4294901760
  %v214 = vsub.f32 %v212, %v213
  %v215 = vand.u32 %v214, 4294901760
  %216 = vmatpush1.msra.mxu0 %v215
  %217 = vmatprep.subr.mxu0 0.0
  %v218 = vand.u32 %v13, 4294901760
  %v219 = vsub.f32 %v13, %v218
  %v220 = vand.u32 %v219, 4294901760
  %v221 = vsub.f32 %v219, %v220
  %v222 = vand.u32 %v221, 4294901760
  %223 = vmatpush1.msra.mxu0 %v222
  %224 = vmatprep.subr.mxu0 0.0
  %v225 = vand.u32 %v12, 4294901760
  %v226 = vsub.f32 %v12, %v225
  %v227 = vand.u32 %v226, 4294901760
  %v228 = vsub.f32 %v226, %v227
  %v229 = vand.u32 %v228, 4294901760
  %230 = vmatpush1.msra.mxu0 %v229
  %231 = vmatprep.subr.mxu0 0.0
  %232 = vmatpush2.msra.mxu0 0.0
  %233 = vmatprep.subr.mxu0 0.0
  %234 = vmatpush2.msra.mxu0 0.0
  %235 = vmatprep.subr.mxu0 0.0
  %236 = vmatpush2.msra.mxu0 0.0
  %237 = vmatprep.subr.mxu0 0.0
  %238 = vmatpush2.msra.mxu0 0.0
  %239 = vmatprep.subr.mxu0 0.0
  %240 = vmatpush2.msra.mxu0 0.0
  %241 = vmatprep.subr.mxu0 0.0
  %242 = vmatpush2.msra.mxu0 0.0
  %243 = vmatprep.subr.mxu0 0.0
  %244 = vmatpush2.msra.mxu0 0.0
  %245 = vmatprep.subr.mxu0 0.0
  %246 = vmatpush2.msra.mxu0 0.0
  %247 = vmatprep.subr.mxu0 0.0
  %248 = vmatpush2.msra.mxu0 0.0
  %249 = vmatprep.subr.mxu0 0.0
  %250 = vmatpush2.msra.mxu0 0.0
  %251 = vmatprep.subr.mxu0 0.0
  %252 = vmatpush2.msra.mxu0 0.0
  %253 = vmatprep.subr.mxu0 0.0
  %254 = vmatpush2.msra.mxu0 0.0
  %255 = vmatprep.subr.mxu0 0.0
  %256 = vmatpush2.msra.mxu0 0.0
  %257 = vmatprep.subr.mxu0 0.0
  %258 = vmatpush2.msra.mxu0 0.0
  %259 = vmatprep.subr.mxu0 0.0
  %260 = vmatpush2.msra.mxu0 0.0
  %261 = vmatprep.subr.mxu0 0.0
  %262 = vmatpush2.msra.mxu0 0.0
  %263 = vmatprep.mubr.f32.mxu0 0.0
  %v264 = vand.u32 %v11, 4294901760
  %265 = vmatmul.mubr.f32.gmra.mxu0 %v264
  %v266 = vpop.f32.mrf.mxu0
  %v267 = vadd.f32 %v116, %v266
  %v268 = vpop.f32.mrf.mxu0
  %269 = vdwg.mxu0
  %270 = vmatprep.subr.mxu0 0.0
  %v271 = vand.u32 %v27, 4294901760
  %v272 = vsub.f32 %v27, %v271
  %273 = vmatpush1.msra.mxu0 %v272
  %274 = vmatprep.subr.mxu0 0.0
  %v275 = vand.u32 %v26, 4294901760
  %v276 = vsub.f32 %v26, %v275
  %277 = vmatpush1.msra.mxu0 %v276
  %278 = vmatprep.subr.mxu0 0.0
  %v279 = vand.u32 %v25, 4294901760
  %v280 = vsub.f32 %v25, %v279
  %281 = vmatpush1.msra.mxu0 %v280
  %282 = vmatprep.subr.mxu0 0.0
  %v283 = vand.u32 %v24, 4294901760
  %v284 = vsub.f32 %v24, %v283
  %285 = vmatpush1.msra.mxu0 %v284
  %286 = vmatprep.subr.mxu0 0.0
  %v287 = vand.u32 %v23, 4294901760
  %v288 = vsub.f32 %v23, %v287
  %289 = vmatpush1.msra.mxu0 %v288
  %290 = vmatprep.subr.mxu0 0.0
  %v291 = vand.u32 %v22, 4294901760
  %v292 = vsub.f32 %v22, %v291
  %293 = vmatpush1.msra.mxu0 %v292
  %294 = vmatprep.subr.mxu0 0.0
  %v295 = vand.u32 %v21, 4294901760
  %v296 = vsub.f32 %v21, %v295
  %297 = vmatpush1.msra.mxu0 %v296
  %298 = vmatprep.subr.mxu0 0.0
  %v299 = vand.u32 %v20, 4294901760
  %v300 = vsub.f32 %v20, %v299
  %301 = vmatpush1.msra.mxu0 %v300
  %302 = vmatprep.subr.mxu0 0.0
  %v303 = vand.u32 %v19, 4294901760
  %v304 = vsub.f32 %v19, %v303
  %305 = vmatpush1.msra.mxu0 %v304
  %306 = vmatprep.subr.mxu0 0.0
  %v307 = vand.u32 %v18, 4294901760
  %v308 = vsub.f32 %v18, %v307
  %309 = vmatpush1.msra.mxu0 %v308
  %310 = vmatprep.subr.mxu0 0.0
  %v311 = vand.u32 %v17, 4294901760
  %v312 = vsub.f32 %v17, %v311
  %313 = vmatpush1.msra.mxu0 %v312
  %314 = vmatprep.subr.mxu0 0.0
  %v315 = vand.u32 %v16, 4294901760
  %v316 = vsub.f32 %v16, %v315
  %317 = vmatpush1.msra.mxu0 %v316
  %318 = vmatprep.subr.mxu0 0.0
  %v319 = vand.u32 %v15, 4294901760
  %v320 = vsub.f32 %v15, %v319
  %321 = vmatpush1.msra.mxu0 %v320
  %322 = vmatprep.subr.mxu0 0.0
  %v323 = vand.u32 %v14, 4294901760
  %v324 = vsub.f32 %v14, %v323
  %325 = vmatpush1.msra.mxu0 %v324
  %326 = vmatprep.subr.mxu0 0.0
  %v327 = vand.u32 %v13, 4294901760
  %v328 = vsub.f32 %v13, %v327
  %329 = vmatpush1.msra.mxu0 %v328
  %330 = vmatprep.subr.mxu0 0.0
  %v331 = vand.u32 %v12, 4294901760
  %v332 = vsub.f32 %v12, %v331
  %333 = vmatpush1.msra.mxu0 %v332
  %334 = vmatprep.subr.mxu0 0.0
  %335 = vmatpush2.msra.mxu0 0.0
  %336 = vmatprep.subr.mxu0 0.0
  %337 = vmatpush2.msra.mxu0 0.0
  %338 = vmatprep.subr.mxu0 0.0
  %339 = vmatpush2.msra.mxu0 0.0
  %340 = vmatprep.subr.mxu0 0.0
  %341 = vmatpush2.msra.mxu0 0.0
  %342 = vmatprep.subr.mxu0 0.0
  %343 = vmatpush2.msra.mxu0 0.0
  %344 = vmatprep.subr.mxu0 0.0
  %345 = vmatpush2.msra.mxu0 0.0
  %346 = vmatprep.subr.mxu0 0.0
  %347 = vmatpush2.msra.mxu0 0.0
  %348 = vmatprep.subr.mxu0 0.0
  %349 = vmatpush2.msra.mxu0 0.0
  %350 = vmatprep.subr.mxu0 0.0
  %351 = vmatpush2.msra.mxu0 0.0
  %352 = vmatprep.subr.mxu0 0.0
  %353 = vmatpush2.msra.mxu0 0.0
  %354 = vmatprep.subr.mxu0 0.0
  %355 = vmatpush2.msra.mxu0 0.0
  %356 = vmatprep.subr.mxu0 0.0
  %357 = vmatpush2.msra.mxu0 0.0
  %358 = vmatprep.subr.mxu0 0.0
  %359 = vmatpush2.msra.mxu0 0.0
  %360 = vmatprep.subr.mxu0 0.0
  %361 = vmatpush2.msra.mxu0 0.0
  %362 = vmatprep.subr.mxu0 0.0
  %363 = vmatpush2.msra.mxu0 0.0
  %364 = vmatprep.subr.mxu0 0.0
  %365 = vmatpush2.msra.mxu0 0.0
  %366 = vmatprep.mubr.f32.mxu0 0.0
  %v367 = vand.u32 %v11, 4294901760
  %v368 = vsub.f32 %v11, %v367
  %369 = vmatmul.mubr.f32.gmra.mxu0 %v368
  %v370 = vpop.f32.mrf.mxu0
  %v371 = vadd.f32 %v267, %v370
  %v372 = vpop.f32.mrf.mxu0
  %373 = vdwg.mxu0
  %374 = vmatprep.subr.mxu0 0.0
  %v375 = vand.u32 %v27, 4294901760
  %376 = vmatpush1.msra.mxu0 %v375
  %377 = vmatprep.subr.mxu0 0.0
  %v378 = vand.u32 %v26, 4294901760
  %379 = vmatpush1.msra.mxu0 %v378
  %380 = vmatprep.subr.mxu0 0.0
  %v381 = vand.u32 %v25, 4294901760
  %382 = vmatpush1.msra.mxu0 %v381
  %383 = vmatprep.subr.mxu0 0.0
  %v384 = vand.u32 %v24, 4294901760
  %385 = vmatpush1.msra.mxu0 %v384
  %386 = vmatprep.subr.mxu0 0.0
  %v387 = vand.u32 %v23, 4294901760
  %388 = vmatpush1.msra.mxu0 %v387
  %389 = vmatprep.subr.mxu0 0.0
  %v390 = vand.u32 %v22, 4294901760
  %391 = vmatpush1.msra.mxu0 %v390
  %392 = vmatprep.subr.mxu0 0.0
  %v393 = vand.u32 %v21, 4294901760
  %394 = vmatpush1.msra.mxu0 %v393
  %395 = vmatprep.subr.mxu0 0.0
  %v396 = vand.u32 %v20, 4294901760
  %397 = vmatpush1.msra.mxu0 %v396
  %398 = vmatprep.subr.mxu0 0.0
  %v399 = vand.u32 %v19, 4294901760
  %400 = vmatpush1.msra.mxu0 %v399
  %401 = vmatprep.subr.mxu0 0.0
  %v402 = vand.u32 %v18, 4294901760
  %403 = vmatpush1.msra.mxu0 %v402
  %404 = vmatprep.subr.mxu0 0.0
  %v405 = vand.u32 %v17, 4294901760
  %406 = vmatpush1.msra.mxu0 %v405
  %407 = vmatprep.subr.mxu0 0.0
  %v408 = vand.u32 %v16, 4294901760
  %409 = vmatpush1.msra.mxu0 %v408
  %410 = vmatprep.subr.mxu0 0.0
  %v411 = vand.u32 %v15, 4294901760
  %412 = vmatpush1.msra.mxu0 %v411
  %413 = vmatprep.subr.mxu0 0.0
  %v414 = vand.u32 %v14, 4294901760
  %415 = vmatpush1.msra.mxu0 %v414
  %416 = vmatprep.subr.mxu0 0.0
  %v417 = vand.u32 %v13, 4294901760
  %418 = vmatpush1.msra.mxu0 %v417
  %419 = vmatprep.subr.mxu0 0.0
  %v420 = vand.u32 %v12, 4294901760
  %421 = vmatpush1.msra.mxu0 %v420
  %422 = vmatprep.subr.mxu0 0.0
  %423 = vmatpush2.msra.mxu0 0.0
  %424 = vmatprep.subr.mxu0 0.0
  %425 = vmatpush2.msra.mxu0 0.0
  %426 = vmatprep.subr.mxu0 0.0
  %427 = vmatpush2.msra.mxu0 0.0
  %428 = vmatprep.subr.mxu0 0.0
  %429 = vmatpush2.msra.mxu0 0.0
  %430 = vmatprep.subr.mxu0 0.0
  %431 = vmatpush2.msra.mxu0 0.0
  %432 = vmatprep.subr.mxu0 0.0
  %433 = vmatpush2.msra.mxu0 0.0
  %434 = vmatprep.subr.mxu0 0.0
  %435 = vmatpush2.msra.mxu0 0.0
  %436 = vmatprep.subr.mxu0 0.0
  %437 = vmatpush2.msra.mxu0 0.0
  %438 = vmatprep.subr.mxu0 0.0
  %439 = vmatpush2.msra.mxu0 0.0
  %440 = vmatprep.subr.mxu0 0.0
  %441 = vmatpush2.msra.mxu0 0.0
  %442 = vmatprep.subr.mxu0 0.0
  %443 = vmatpush2.msra.mxu0 0.0
  %444 = vmatprep.subr.mxu0 0.0
  %445 = vmatpush2.msra.mxu0 0.0
  %446 = vmatprep.subr.mxu0 0.0
  %447 = vmatpush2.msra.mxu0 0.0
  %448 = vmatprep.subr.mxu0 0.0
  %449 = vmatpush2.msra.mxu0 0.0
  %450 = vmatprep.subr.mxu0 0.0
  %451 = vmatpush2.msra.mxu0 0.0
  %452 = vmatprep.subr.mxu0 0.0
  %453 = vmatpush2.msra.mxu0 0.0
  %454 = vmatprep.mubr.f32.mxu0 0.0
  %v455 = vand.u32 %v11, 4294901760
  %v456 = vsub.f32 %v11, %v455
  %v457 = vand.u32 %v456, 4294901760
  %458 = vmatmul.mubr.f32.gmra.mxu0 %v457
  %v459 = vpop.f32.mrf.mxu0
  %v460 = vadd.f32 %v371, %v459
  %v461 = vpop.f32.mrf.mxu0
  %462 = vdwg.mxu0
  %463 = vmatprep.subr.mxu0 0.0
  %v464 = vand.u32 %v27, 4294901760
  %v465 = vsub.f32 %v27, %v464
  %v466 = vand.u32 %v465, 4294901760
  %467 = vmatpush1.msra.mxu0 %v466
  %468 = vmatprep.subr.mxu0 0.0
  %v469 = vand.u32 %v26, 4294901760
  %v470 = vsub.f32 %v26, %v469
  %v471 = vand.u32 %v470, 4294901760
  %472 = vmatpush1.msra.mxu0 %v471
  %473 = vmatprep.subr.mxu0 0.0
  %v474 = vand.u32 %v25, 4294901760
  %v475 = vsub.f32 %v25, %v474
  %v476 = vand.u32 %v475, 4294901760
  %477 = vmatpush1.msra.mxu0 %v476
  %478 = vmatprep.subr.mxu0 0.0
  %v479 = vand.u32 %v24, 4294901760
  %v480 = vsub.f32 %v24, %v479
  %v481 = vand.u32 %v480, 4294901760
  %482 = vmatpush1.msra.mxu0 %v481
  %483 = vmatprep.subr.mxu0 0.0
  %v484 = vand.u32 %v23, 4294901760
  %v485 = vsub.f32 %v23, %v484
  %v486 = vand.u32 %v485, 4294901760
  %487 = vmatpush1.msra.mxu0 %v486
  %488 = vmatprep.subr.mxu0 0.0
  %v489 = vand.u32 %v22, 4294901760
  %v490 = vsub.f32 %v22, %v489
  %v491 = vand.u32 %v490, 4294901760
  %492 = vmatpush1.msra.mxu0 %v491
  %493 = vmatprep.subr.mxu0 0.0
  %v494 = vand.u32 %v21, 4294901760
  %v495 = vsub.f32 %v21, %v494
  %v496 = vand.u32 %v495, 4294901760
  %497 = vmatpush1.msra.mxu0 %v496
  %498 = vmatprep.subr.mxu0 0.0
  %v499 = vand.u32 %v20, 4294901760
  %v500 = vsub.f32 %v20, %v499
  %v501 = vand.u32 %v500, 4294901760
  %502 = vmatpush1.msra.mxu0 %v501
  %503 = vmatprep.subr.mxu0 0.0
  %v504 = vand.u32 %v19, 4294901760
  %v505 = vsub.f32 %v19, %v504
  %v506 = vand.u32 %v505, 4294901760
  %507 = vmatpush1.msra.mxu0 %v506
  %508 = vmatprep.subr.mxu0 0.0
  %v509 = vand.u32 %v18, 4294901760
  %v510 = vsub.f32 %v18, %v509
  %v511 = vand.u32 %v510, 4294901760
  %512 = vmatpush1.msra.mxu0 %v511
  %513 = vmatprep.subr.mxu0 0.0
  %v514 = vand.u32 %v17, 4294901760
  %v515 = vsub.f32 %v17, %v514
  %v516 = vand.u32 %v515, 4294901760
  %517 = vmatpush1.msra.mxu0 %v516
  %518 = vmatprep.subr.mxu0 0.0
  %v519 = vand.u32 %v16, 4294901760
  %v520 = vsub.f32 %v16, %v519
  %v521 = vand.u32 %v520, 4294901760
  %522 = vmatpush1.msra.mxu0 %v521
  %523 = vmatprep.subr.mxu0 0.0
  %v524 = vand.u32 %v15, 4294901760
  %v525 = vsub.f32 %v15, %v524
  %v526 = vand.u32 %v525, 4294901760
  %527 = vmatpush1.msra.mxu0 %v526
  %528 = vmatprep.subr.mxu0 0.0
  %v529 = vand.u32 %v14, 4294901760
  %v530 = vsub.f32 %v14, %v529
  %v531 = vand.u32 %v530, 4294901760
  %532 = vmatpush1.msra.mxu0 %v531
  %533 = vmatprep.subr.mxu0 0.0
  %v534 = vand.u32 %v13, 4294901760
  %v535 = vsub.f32 %v13, %v534
  %v536 = vand.u32 %v535, 4294901760
  %537 = vmatpush1.msra.mxu0 %v536
  %538 = vmatprep.subr.mxu0 0.0
  %v539 = vand.u32 %v12, 4294901760
  %v540 = vsub.f32 %v12, %v539
  %v541 = vand.u32 %v540, 4294901760
  %542 = vmatpush1.msra.mxu0 %v541
  %543 = vmatprep.subr.mxu0 0.0
  %544 = vmatpush2.msra.mxu0 0.0
  %545 = vmatprep.subr.mxu0 0.0
  %546 = vmatpush2.msra.mxu0 0.0
  %547 = vmatprep.subr.mxu0 0.0
  %548 = vmatpush2.msra.mxu0 0.0
  %549 = vmatprep.subr.mxu0 0.0
  %550 = vmatpush2.msra.mxu0 0.0
  %551 = vmatprep.subr.mxu0 0.0
  %552 = vmatpush2.msra.mxu0 0.0
  %553 = vmatprep.subr.mxu0 0.0
  %554 = vmatpush2.msra.mxu0 0.0
  %555 = vmatprep.subr.mxu0 0.0
  %556 = vmatpush2.msra.mxu0 0.0
  %557 = vmatprep.subr.mxu0 0.0
  %558 = vmatpush2.msra.mxu0 0.0
  %559 = vmatprep.subr.mxu0 0.0
  %560 = vmatpush2.msra.mxu0 0.0
  %561 = vmatprep.subr.mxu0 0.0
  %562 = vmatpush2.msra.mxu0 0.0
  %563 = vmatprep.subr.mxu0 0.0
  %564 = vmatpush2.msra.mxu0 0.0
  %565 = vmatprep.subr.mxu0 0.0
  %566 = vmatpush2.msra.mxu0 0.0
  %567 = vmatprep.subr.mxu0 0.0
  %568 = vmatpush2.msra.mxu0 0.0
  %569 = vmatprep.subr.mxu0 0.0
  %570 = vmatpush2.msra.mxu0 0.0
  %571 = vmatprep.subr.mxu0 0.0
  %572 = vmatpush2.msra.mxu0 0.0
  %573 = vmatprep.subr.mxu0 0.0
  %574 = vmatpush2.msra.mxu0 0.0
  %575 = vmatprep.mubr.f32.mxu0 0.0
  %v576 = vand.u32 %v11, 4294901760
  %577 = vmatmul.mubr.f32.gmra.mxu0 %v576
  %v578 = vpop.f32.mrf.mxu0
  %v579 = vadd.f32 %v460, %v578
  %v580 = vpop.f32.mrf.mxu0
  %581 = vdwg.mxu0
  %582 = vmatprep.subr.mxu0 0.0
  %v583 = vand.u32 %v27, 4294901760
  %584 = vmatpush1.msra.mxu0 %v583
  %585 = vmatprep.subr.mxu0 0.0
  %v586 = vand.u32 %v26, 4294901760
  %587 = vmatpush1.msra.mxu0 %v586
  %588 = vmatprep.subr.mxu0 0.0
  %v589 = vand.u32 %v25, 4294901760
  %590 = vmatpush1.msra.mxu0 %v589
  %591 = vmatprep.subr.mxu0 0.0
  %v592 = vand.u32 %v24, 4294901760
  %593 = vmatpush1.msra.mxu0 %v592
  %594 = vmatprep.subr.mxu0 0.0
  %v595 = vand.u32 %v23, 4294901760
  %596 = vmatpush1.msra.mxu0 %v595
  %597 = vmatprep.subr.mxu0 0.0
  %v598 = vand.u32 %v22, 4294901760
  %599 = vmatpush1.msra.mxu0 %v598
  %600 = vmatprep.subr.mxu0 0.0
  %v601 = vand.u32 %v21, 4294901760
  %602 = vmatpush1.msra.mxu0 %v601
  %603 = vmatprep.subr.mxu0 0.0
  %v604 = vand.u32 %v20, 4294901760
  %605 = vmatpush1.msra.mxu0 %v604
  %606 = vmatprep.subr.mxu0 0.0
  %v607 = vand.u32 %v19, 4294901760
  %608 = vmatpush1.msra.mxu0 %v607
  %609 = vmatprep.subr.mxu0 0.0
  %v610 = vand.u32 %v18, 4294901760
  %611 = vmatpush1.msra.mxu0 %v610
  %612 = vmatprep.subr.mxu0 0.0
  %v613 = vand.u32 %v17, 4294901760
  %614 = vmatpush1.msra.mxu0 %v613
  %615 = vmatprep.subr.mxu0 0.0
  %v616 = vand.u32 %v16, 4294901760
  %617 = vmatpush1.msra.mxu0 %v616
  %618 = vmatprep.subr.mxu0 0.0
  %v619 = vand.u32 %v15, 4294901760
  %620 = vmatpush1.msra.mxu0 %v619
  %621 = vmatprep.subr.mxu0 0.0
  %v622 = vand.u32 %v14, 4294901760
  %623 = vmatpush1.msra.mxu0 %v622
  %624 = vmatprep.subr.mxu0 0.0
  %v625 = vand.u32 %v13, 4294901760
  %626 = vmatpush1.msra.mxu0 %v625
  %627 = vmatprep.subr.mxu0 0.0
  %v628 = vand.u32 %v12, 4294901760
  %629 = vmatpush1.msra.mxu0 %v628
  %630 = vmatprep.subr.mxu0 0.0
  %631 = vmatpush2.msra.mxu0 0.0
  %632 = vmatprep.subr.mxu0 0.0
  %633 = vmatpush2.msra.mxu0 0.0
  %634 = vmatprep.subr.mxu0 0.0
  %635 = vmatpush2.msra.mxu0 0.0
  %636 = vmatprep.subr.mxu0 0.0
  %637 = vmatpush2.msra.mxu0 0.0
  %638 = vmatprep.subr.mxu0 0.0
  %639 = vmatpush2.msra.mxu0 0.0
  %640 = vmatprep.subr.mxu0 0.0
  %641 = vmatpush2.msra.mxu0 0.0
  %642 = vmatprep.subr.mxu0 0.0
  %643 = vmatpush2.msra.mxu0 0.0
  %644 = vmatprep.subr.mxu0 0.0
  %645 = vmatpush2.msra.mxu0 0.0
  %646 = vmatprep.subr.mxu0 0.0
  %647 = vmatpush2.msra.mxu0 0.0
  %648 = vmatprep.subr.mxu0 0.0
  %649 = vmatpush2.msra.mxu0 0.0
  %650 = vmatprep.subr.mxu0 0.0
  %651 = vmatpush2.msra.mxu0 0.0
  %652 = vmatprep.subr.mxu0 0.0
  %653 = vmatpush2.msra.mxu0 0.0
  %654 = vmatprep.subr.mxu0 0.0
  %655 = vmatpush2.msra.mxu0 0.0
  %656 = vmatprep.subr.mxu0 0.0
  %657 = vmatpush2.msra.mxu0 0.0
  %658 = vmatprep.subr.mxu0 0.0
  %659 = vmatpush2.msra.mxu0 0.0
  %660 = vmatprep.subr.mxu0 0.0
  %661 = vmatpush2.msra.mxu0 0.0
  %662 = vmatprep.mubr.f32.mxu0 0.0
  %v663 = vand.u32 %v11, 4294901760
  %664 = vmatmul.mubr.f32.gmra.mxu0 %v663
  %v665 = vpop.f32.mrf.mxu0
  %v666 = vadd.f32 %v579, %v665
  %v667 = vpop.f32.mrf.mxu0
  %668 = vdwg.mxu0
  %v669 = vmul.f32 %v666, 0.03125
  %v670 = vsub.f32 %v11, %v669
  %v671 = vmul.f32 %v670, %v670
  %672 = vmatprep.subr.mxu0 0.0
  %v673 = vand.u32 %v27, 4294901760
  %674 = vmatpush1.msra.mxu0 %v673
  %675 = vmatprep.subr.mxu0 0.0
  %v676 = vand.u32 %v26, 4294901760
  %677 = vmatpush1.msra.mxu0 %v676
  %678 = vmatprep.subr.mxu0 0.0
  %v679 = vand.u32 %v25, 4294901760
  %680 = vmatpush1.msra.mxu0 %v679
  %681 = vmatprep.subr.mxu0 0.0
  %v682 = vand.u32 %v24, 4294901760
  %683 = vmatpush1.msra.mxu0 %v682
  %684 = vmatprep.subr.mxu0 0.0
  %v685 = vand.u32 %v23, 4294901760
  %686 = vmatpush1.msra.mxu0 %v685
  %687 = vmatprep.subr.mxu0 0.0
  %v688 = vand.u32 %v22, 4294901760
  %689 = vmatpush1.msra.mxu0 %v688
  %690 = vmatprep.subr.mxu0 0.0
  %v691 = vand.u32 %v21, 4294901760
  %692 = vmatpush1.msra.mxu0 %v691
  %693 = vmatprep.subr.mxu0 0.0
  %v694 = vand.u32 %v20, 4294901760
  %695 = vmatpush1.msra.mxu0 %v694
  %696 = vmatprep.subr.mxu0 0.0
  %v697 = vand.u32 %v19, 4294901760
  %698 = vmatpush1.msra.mxu0 %v697
  %699 = vmatprep.subr.mxu0 0.0
  %v700 = vand.u32 %v18, 4294901760
  %701 = vmatpush1.msra.mxu0 %v700
  %702 = vmatprep.subr.mxu0 0.0
  %v703 = vand.u32 %v17, 4294901760
  %704 = vmatpush1.msra.mxu0 %v703
  %705 = vmatprep.subr.mxu0 0.0
  %v706 = vand.u32 %v16, 4294901760
  %707 = vmatpush1.msra.mxu0 %v706
  %708 = vmatprep.subr.mxu0 0.0
  %v709 = vand.u32 %v15, 4294901760
  %710 = vmatpush1.msra.mxu0 %v709
  %711 = vmatprep.subr.mxu0 0.0
  %v712 = vand.u32 %v14, 4294901760
  %713 = vmatpush1.msra.mxu0 %v712
  %714 = vmatprep.subr.mxu0 0.0
  %v715 = vand.u32 %v13, 4294901760
  %716 = vmatpush1.msra.mxu0 %v715
  %717 = vmatprep.subr.mxu0 0.0
  %v718 = vand.u32 %v12, 4294901760
  %719 = vmatpush1.msra.mxu0 %v718
  %720 = vmatprep.subr.mxu0 0.0
  %721 = vmatpush2.msra.mxu0 0.0
  %722 = vmatprep.subr.mxu0 0.0
  %723 = vmatpush2.msra.mxu0 0.0
  %724 = vmatprep.subr.mxu0 0.0
  %725 = vmatpush2.msra.mxu0 0.0
  %726 = vmatprep.subr.mxu0 0.0
  %727 = vmatpush2.msra.mxu0 0.0
  %728 = vmatprep.subr.mxu0 0.0
  %729 = vmatpush2.msra.mxu0 0.0
  %730 = vmatprep.subr.mxu0 0.0
  %731 = vmatpush2.msra.mxu0 0.0
  %732 = vmatprep.subr.mxu0 0.0
  %733 = vmatpush2.msra.mxu0 0.0
  %734 = vmatprep.subr.mxu0 0.0
  %735 = vmatpush2.msra.mxu0 0.0
  %736 = vmatprep.subr.mxu0 0.0
  %737 = vmatpush2.msra.mxu0 0.0
  %738 = vmatprep.subr.mxu0 0.0
  %739 = vmatpush2.msra.mxu0 0.0
  %740 = vmatprep.subr.mxu0 0.0
  %741 = vmatpush2.msra.mxu0 0.0
  %742 = vmatprep.subr.mxu0 0.0
  %743 = vmatpush2.msra.mxu0 0.0
  %744 = vmatprep.subr.mxu0 0.0
  %745 = vmatpush2.msra.mxu0 0.0
  %746 = vmatprep.subr.mxu0 0.0
  %747 = vmatpush2.msra.mxu0 0.0
  %748 = vmatprep.subr.mxu0 0.0
  %749 = vmatpush2.msra.mxu0 0.0
  %750 = vmatprep.subr.mxu0 0.0
  %751 = vmatpush2.msra.mxu0 0.0
  %752 = vmatprep.mubr.f32.mxu0 0.0
  %v753 = vand.u32 %v671, 4294901760
  %v754 = vsub.f32 %v671, %v753
  %v755 = vand.u32 %v754, 4294901760
  %v756 = vsub.f32 %v754, %v755
  %v757 = vand.u32 %v756, 4294901760
  %758 = vmatmul.mubr.f32.gmra.mxu0 %v757
  %v759 = vpop.f32.mrf.mxu0
  %v760 = vadd.f32 0.0, %v759
  %v761 = vpop.f32.mrf.mxu0
  %762 = vdwg.mxu0
  %763 = vmatprep.subr.mxu0 0.0
  %v764 = vand.u32 %v27, 4294901760
  %v765 = vsub.f32 %v27, %v764
  %v766 = vand.u32 %v765, 4294901760
  %v767 = vsub.f32 %v765, %v766
  %v768 = vand.u32 %v767, 4294901760
  %769 = vmatpush1.msra.mxu0 %v768
  %770 = vmatprep.subr.mxu0 0.0
  %v771 = vand.u32 %v26, 4294901760
  %v772 = vsub.f32 %v26, %v771
  %v773 = vand.u32 %v772, 4294901760
  %v774 = vsub.f32 %v772, %v773
  %v775 = vand.u32 %v774, 4294901760
  %776 = vmatpush1.msra.mxu0 %v775
  %777 = vmatprep.subr.mxu0 0.0
  %v778 = vand.u32 %v25, 4294901760
  %v779 = vsub.f32 %v25, %v778
  %v780 = vand.u32 %v779, 4294901760
  %v781 = vsub.f32 %v779, %v780
  %v782 = vand.u32 %v781, 4294901760
  %783 = vmatpush1.msra.mxu0 %v782
  %784 = vmatprep.subr.mxu0 0.0
  %v785 = vand.u32 %v24, 4294901760
  %v786 = vsub.f32 %v24, %v785
  %v787 = vand.u32 %v786, 4294901760
  %v788 = vsub.f32 %v786, %v787
  %v789 = vand.u32 %v788, 4294901760
  %790 = vmatpush1.msra.mxu0 %v789
  %791 = vmatprep.subr.mxu0 0.0
  %v792 = vand.u32 %v23, 4294901760
  %v793 = vsub.f32 %v23, %v792
  %v794 = vand.u32 %v793, 4294901760
  %v795 = vsub.f32 %v793, %v794
  %v796 = vand.u32 %v795, 4294901760
  %797 = vmatpush1.msra.mxu0 %v796
  %798 = vmatprep.subr.mxu0 0.0
  %v799 = vand.u32 %v22, 4294901760
  %v800 = vsub.f32 %v22, %v799
  %v801 = vand.u32 %v800, 4294901760
  %v802 = vsub.f32 %v800, %v801
  %v803 = vand.u32 %v802, 4294901760
  %804 = vmatpush1.msra.mxu0 %v803
  %805 = vmatprep.subr.mxu0 0.0
  %v806 = vand.u32 %v21, 4294901760
  %v807 = vsub.f32 %v21, %v806
  %v808 = vand.u32 %v807, 4294901760
  %v809 = vsub.f32 %v807, %v808
  %v810 = vand.u32 %v809, 4294901760
  %811 = vmatpush1.msra.mxu0 %v810
  %812 = vmatprep.subr.mxu0 0.0
  %v813 = vand.u32 %v20, 4294901760
  %v814 = vsub.f32 %v20, %v813
  %v815 = vand.u32 %v814, 4294901760
  %v816 = vsub.f32 %v814, %v815
  %v817 = vand.u32 %v816, 4294901760
  %818 = vmatpush1.msra.mxu0 %v817
  %819 = vmatprep.subr.mxu0 0.0
  %v820 = vand.u32 %v19, 4294901760
  %v821 = vsub.f32 %v19, %v820
  %v822 = vand.u32 %v821, 4294901760
  %v823 = vsub.f32 %v821, %v822
  %v824 = vand.u32 %v823, 4294901760
  %825 = vmatpush1.msra.mxu0 %v824
  %826 = vmatprep.subr.mxu0 0.0
  %v827 = vand.u32 %v18, 4294901760
  %v828 = vsub.f32 %v18, %v827
  %v829 = vand.u32 %v828, 4294901760
  %v830 = vsub.f32 %v828, %v829
  %v831 = vand.u32 %v830, 4294901760
  %832 = vmatpush1.msra.mxu0 %v831
  %833 = vmatprep.subr.mxu0 0.0
  %v834 = vand.u32 %v17, 4294901760
  %v835 = vsub.f32 %v17, %v834
  %v836 = vand.u32 %v835, 4294901760
  %v837 = vsub.f32 %v835, %v836
  %v838 = vand.u32 %v837, 4294901760
  %839 = vmatpush1.msra.mxu0 %v838
  %840 = vmatprep.subr.mxu0 0.0
  %v841 = vand.u32 %v16, 4294901760
  %v842 = vsub.f32 %v16, %v841
  %v843 = vand.u32 %v842, 4294901760
  %v844 = vsub.f32 %v842, %v843
  %v845 = vand.u32 %v844, 4294901760
  %846 = vmatpush1.msra.mxu0 %v845
  %847 = vmatprep.subr.mxu0 0.0
  %v848 = vand.u32 %v15, 4294901760
  %v849 = vsub.f32 %v15, %v848
  %v850 = vand.u32 %v849, 4294901760
  %v851 = vsub.f32 %v849, %v850
  %v852 = vand.u32 %v851, 4294901760
  %853 = vmatpush1.msra.mxu0 %v852
  %854 = vmatprep.subr.mxu0 0.0
  %v855 = vand.u32 %v14, 4294901760
  %v856 = vsub.f32 %v14, %v855
  %v857 = vand.u32 %v856, 4294901760
  %v858 = vsub.f32 %v856, %v857
  %v859 = vand.u32 %v858, 4294901760
  %860 = vmatpush1.msra.mxu0 %v859
  %861 = vmatprep.subr.mxu0 0.0
  %v862 = vand.u32 %v13, 4294901760
  %v863 = vsub.f32 %v13, %v862
  %v864 = vand.u32 %v863, 4294901760
  %v865 = vsub.f32 %v863, %v864
  %v866 = vand.u32 %v865, 4294901760
  %867 = vmatpush1.msra.mxu0 %v866
  %868 = vmatprep.subr.mxu0 0.0
  %v869 = vand.u32 %v12, 4294901760
  %v870 = vsub.f32 %v12, %v869
  %v871 = vand.u32 %v870, 4294901760
  %v872 = vsub.f32 %v870, %v871
  %v873 = vand.u32 %v872, 4294901760
  %874 = vmatpush1.msra.mxu0 %v873
  %875 = vmatprep.subr.mxu0 0.0
  %876 = vmatpush2.msra.mxu0 0.0
  %877 = vmatprep.subr.mxu0 0.0
  %878 = vmatpush2.msra.mxu0 0.0
  %879 = vmatprep.subr.mxu0 0.0
  %880 = vmatpush2.msra.mxu0 0.0
  %881 = vmatprep.subr.mxu0 0.0
  %882 = vmatpush2.msra.mxu0 0.0
  %883 = vmatprep.subr.mxu0 0.0
  %884 = vmatpush2.msra.mxu0 0.0
  %885 = vmatprep.subr.mxu0 0.0
  %886 = vmatpush2.msra.mxu0 0.0
  %887 = vmatprep.subr.mxu0 0.0
  %888 = vmatpush2.msra.mxu0 0.0
  %889 = vmatprep.subr.mxu0 0.0
  %890 = vmatpush2.msra.mxu0 0.0
  %891 = vmatprep.subr.mxu0 0.0
  %892 = vmatpush2.msra.mxu0 0.0
  %893 = vmatprep.subr.mxu0 0.0
  %894 = vmatpush2.msra.mxu0 0.0
  %895 = vmatprep.subr.mxu0 0.0
  %896 = vmatpush2.msra.mxu0 0.0
  %897 = vmatprep.subr.mxu0 0.0
  %898 = vmatpush2.msra.mxu0 0.0
  %899 = vmatprep.subr.mxu0 0.0
  %900 = vmatpush2.msra.mxu0 0.0
  %901 = vmatprep.subr.mxu0 0.0
  %902 = vmatpush2.msra.mxu0 0.0
  %903 = vmatprep.subr.mxu0 0.0
  %904 = vmatpush2.msra.mxu0 0.0
  %905 = vmatprep.subr.mxu0 0.0
  %906 = vmatpush2.msra.mxu0 0.0
  %907 = vmatprep.mubr.f32.mxu0 0.0
  %v908 = vand.u32 %v671, 4294901760
  %909 = vmatmul.mubr.f32.gmra.mxu0 %v908
  %v910 = vpop.f32.mrf.mxu0
  %v911 = vadd.f32 %v760, %v910
  %v912 = vpop.f32.mrf.mxu0
  %913 = vdwg.mxu0
  %914 = vmatprep.subr.mxu0 0.0
  %v915 = vand.u32 %v27, 4294901760
  %v916 = vsub.f32 %v27, %v915
  %917 = vmatpush1.msra.mxu0 %v916
  %918 = vmatprep.subr.mxu0 0.0
  %v919 = vand.u32 %v26, 4294901760
  %v920 = vsub.f32 %v26, %v919
  %921 = vmatpush1.msra.mxu0 %v920
  %922 = vmatprep.subr.mxu0 0.0
  %v923 = vand.u32 %v25, 4294901760
  %v924 = vsub.f32 %v25, %v923
  %925 = vmatpush1.msra.mxu0 %v924
  %926 = vmatprep.subr.mxu0 0.0
  %v927 = vand.u32 %v24, 4294901760
  %v928 = vsub.f32 %v24, %v927
  %929 = vmatpush1.msra.mxu0 %v928
  %930 = vmatprep.subr.mxu0 0.0
  %v931 = vand.u32 %v23, 4294901760
  %v932 = vsub.f32 %v23, %v931
  %933 = vmatpush1.msra.mxu0 %v932
  %934 = vmatprep.subr.mxu0 0.0
  %v935 = vand.u32 %v22, 4294901760
  %v936 = vsub.f32 %v22, %v935
  %937 = vmatpush1.msra.mxu0 %v936
  %938 = vmatprep.subr.mxu0 0.0
  %v939 = vand.u32 %v21, 4294901760
  %v940 = vsub.f32 %v21, %v939
  %941 = vmatpush1.msra.mxu0 %v940
  %942 = vmatprep.subr.mxu0 0.0
  %v943 = vand.u32 %v20, 4294901760
  %v944 = vsub.f32 %v20, %v943
  %945 = vmatpush1.msra.mxu0 %v944
  %946 = vmatprep.subr.mxu0 0.0
  %v947 = vand.u32 %v19, 4294901760
  %v948 = vsub.f32 %v19, %v947
  %949 = vmatpush1.msra.mxu0 %v948
  %950 = vmatprep.subr.mxu0 0.0
  %v951 = vand.u32 %v18, 4294901760
  %v952 = vsub.f32 %v18, %v951
  %953 = vmatpush1.msra.mxu0 %v952
  %954 = vmatprep.subr.mxu0 0.0
  %v955 = vand.u32 %v17, 4294901760
  %v956 = vsub.f32 %v17, %v955
  %957 = vmatpush1.msra.mxu0 %v956
  %958 = vmatprep.subr.mxu0 0.0
  %v959 = vand.u32 %v16, 4294901760
  %v960 = vsub.f32 %v16, %v959
  %961 = vmatpush1.msra.mxu0 %v960
  %962 = vmatprep.subr.mxu0 0.0
  %v963 = vand.u32 %v15, 4294901760
  %v964 = vsub.f32 %v15, %v963
  %965 = vmatpush1.msra.mxu0 %v964
  %966 = vmatprep.subr.mxu0 0.0
  %v967 = vand.u32 %v14, 4294901760
  %v968 = vsub.f32 %v14, %v967
  %969 = vmatpush1.msra.mxu0 %v968
  %970 = vmatprep.subr.mxu0 0.0
  %v971 = vand.u32 %v13, 4294901760
  %v972 = vsub.f32 %v13, %v971
  %973 = vmatpush1.msra.mxu0 %v972
  %974 = vmatprep.subr.mxu0 0.0
  %v975 = vand.u32 %v12, 4294901760
  %v976 = vsub.f32 %v12, %v975
  %977 = vmatpush1.msra.mxu0 %v976
  %978 = vmatprep.subr.mxu0 0.0
  %979 = vmatpush2.msra.mxu0 0.0
  %980 = vmatprep.subr.mxu0 0.0
  %981 = vmatpush2.msra.mxu0 0.0
  %982 = vmatprep.subr.mxu0 0.0
  %983 = vmatpush2.msra.mxu0 0.0
  %984 = vmatprep.subr.mxu0 0.0
  %985 = vmatpush2.msra.mxu0 0.0
  %986 = vmatprep.subr.mxu0 0.0
  %987 = vmatpush2.msra.mxu0 0.0
  %988 = vmatprep.subr.mxu0 0.0
  %989 = vmatpush2.msra.mxu0 0.0
  %990 = vmatprep.subr.mxu0 0.0
  %991 = vmatpush2.msra.mxu0 0.0
  %992 = vmatprep.subr.mxu0 0.0
  %993 = vmatpush2.msra.mxu0 0.0
  %994 = vmatprep.subr.mxu0 0.0
  %995 = vmatpush2.msra.mxu0 0.0
  %996 = vmatprep.subr.mxu0 0.0
  %997 = vmatpush2.msra.mxu0 0.0
  %998 = vmatprep.subr.mxu0 0.0
  %999 = vmatpush2.msra.mxu0 0.0
  %1000 = vmatprep.subr.mxu0 0.0
  %1001 = vmatpush2.msra.mxu0 0.0
  %1002 = vmatprep.subr.mxu0 0.0
  %1003 = vmatpush2.msra.mxu0 0.0
  %1004 = vmatprep.subr.mxu0 0.0
  %1005 = vmatpush2.msra.mxu0 0.0
  %1006 = vmatprep.subr.mxu0 0.0
  %1007 = vmatpush2.msra.mxu0 0.0
  %1008 = vmatprep.subr.mxu0 0.0
  %1009 = vmatpush2.msra.mxu0 0.0
  %1010 = vmatprep.mubr.f32.mxu0 0.0
  %v1011 = vand.u32 %v671, 4294901760
  %v1012 = vsub.f32 %v671, %v1011
  %1013 = vmatmul.mubr.f32.gmra.mxu0 %v1012
  %v1014 = vpop.f32.mrf.mxu0
  %v1015 = vadd.f32 %v911, %v1014
  %v1016 = vpop.f32.mrf.mxu0
  %1017 = vdwg.mxu0
  %1018 = vmatprep.subr.mxu0 0.0
  %v1019 = vand.u32 %v27, 4294901760
  %1020 = vmatpush1.msra.mxu0 %v1019
  %1021 = vmatprep.subr.mxu0 0.0
  %v1022 = vand.u32 %v26, 4294901760
  %1023 = vmatpush1.msra.mxu0 %v1022
  %1024 = vmatprep.subr.mxu0 0.0
  %v1025 = vand.u32 %v25, 4294901760
  %1026 = vmatpush1.msra.mxu0 %v1025
  %1027 = vmatprep.subr.mxu0 0.0
  %v1028 = vand.u32 %v24, 4294901760
  %1029 = vmatpush1.msra.mxu0 %v1028
  %1030 = vmatprep.subr.mxu0 0.0
  %v1031 = vand.u32 %v23, 4294901760
  %1032 = vmatpush1.msra.mxu0 %v1031
  %1033 = vmatprep.subr.mxu0 0.0
  %v1034 = vand.u32 %v22, 4294901760
  %1035 = vmatpush1.msra.mxu0 %v1034
  %1036 = vmatprep.subr.mxu0 0.0
  %v1037 = vand.u32 %v21, 4294901760
  %1038 = vmatpush1.msra.mxu0 %v1037
  %1039 = vmatprep.subr.mxu0 0.0
  %v1040 = vand.u32 %v20, 4294901760
  %1041 = vmatpush1.msra.mxu0 %v1040
  %1042 = vmatprep.subr.mxu0 0.0
  %v1043 = vand.u32 %v19, 4294901760
  %1044 = vmatpush1.msra.mxu0 %v1043
  %1045 = vmatprep.subr.mxu0 0.0
  %v1046 = vand.u32 %v18, 4294901760
  %1047 = vmatpush1.msra.mxu0 %v1046
  %1048 = vmatprep.subr.mxu0 0.0
  %v1049 = vand.u32 %v17, 4294901760
  %1050 = vmatpush1.msra.mxu0 %v1049
  %1051 = vmatprep.subr.mxu0 0.0
  %v1052 = vand.u32 %v16, 4294901760
  %1053 = vmatpush1.msra.mxu0 %v1052
  %1054 = vmatprep.subr.mxu0 0.0
  %v1055 = vand.u32 %v15, 4294901760
  %1056 = vmatpush1.msra.mxu0 %v1055
  %1057 = vmatprep.subr.mxu0 0.0
  %v1058 = vand.u32 %v14, 4294901760
  %1059 = vmatpush1.msra.mxu0 %v1058
  %1060 = vmatprep.subr.mxu0 0.0
  %v1061 = vand.u32 %v13, 4294901760
  %1062 = vmatpush1.msra.mxu0 %v1061
  %1063 = vmatprep.subr.mxu0 0.0
  %v1064 = vand.u32 %v12, 4294901760
  %1065 = vmatpush1.msra.mxu0 %v1064
  %1066 = vmatprep.subr.mxu0 0.0
  %1067 = vmatpush2.msra.mxu0 0.0
  %1068 = vmatprep.subr.mxu0 0.0
  %1069 = vmatpush2.msra.mxu0 0.0
  %1070 = vmatprep.subr.mxu0 0.0
  %1071 = vmatpush2.msra.mxu0 0.0
  %1072 = vmatprep.subr.mxu0 0.0
  %1073 = vmatpush2.msra.mxu0 0.0
  %1074 = vmatprep.subr.mxu0 0.0
  %1075 = vmatpush2.msra.mxu0 0.0
  %1076 = vmatprep.subr.mxu0 0.0
  %1077 = vmatpush2.msra.mxu0 0.0
  %1078 = vmatprep.subr.mxu0 0.0
  %1079 = vmatpush2.msra.mxu0 0.0
  %1080 = vmatprep.subr.mxu0 0.0
  %1081 = vmatpush2.msra.mxu0 0.0
  %1082 = vmatprep.subr.mxu0 0.0
  %1083 = vmatpush2.msra.mxu0 0.0
  %1084 = vmatprep.subr.mxu0 0.0
  %1085 = vmatpush2.msra.mxu0 0.0
  %1086 = vmatprep.subr.mxu0 0.0
  %1087 = vmatpush2.msra.mxu0 0.0
  %1088 = vmatprep.subr.mxu0 0.0
  %1089 = vmatpush2.msra.mxu0 0.0
  %1090 = vmatprep.subr.mxu0 0.0
  %1091 = vmatpush2.msra.mxu0 0.0
  %1092 = vmatprep.subr.mxu0 0.0
  %1093 = vmatpush2.msra.mxu0 0.0
  %1094 = vmatprep.subr.mxu0 0.0
  %1095 = vmatpush2.msra.mxu0 0.0
  %1096 = vmatprep.subr.mxu0 0.0
  %1097 = vmatpush2.msra.mxu0 0.0
  %1098 = vmatprep.mubr.f32.mxu0 0.0
  %v1099 = vand.u32 %v671, 4294901760
  %v1100 = vsub.f32 %v671, %v1099
  %v1101 = vand.u32 %v1100, 4294901760
  %1102 = vmatmul.mubr.f32.gmra.mxu0 %v1101
  %v1103 = vpop.f32.mrf.mxu0
  %v1104 = vadd.f32 %v1015, %v1103
  %v1105 = vpop.f32.mrf.mxu0
  %1106 = vdwg.mxu0
  %1107 = vmatprep.subr.mxu0 0.0
  %v1108 = vand.u32 %v27, 4294901760
  %v1109 = vsub.f32 %v27, %v1108
  %v1110 = vand.u32 %v1109, 4294901760
  %1111 = vmatpush1.msra.mxu0 %v1110
  %1112 = vmatprep.subr.mxu0 0.0
  %v1113 = vand.u32 %v26, 4294901760
  %v1114 = vsub.f32 %v26, %v1113
  %v1115 = vand.u32 %v1114, 4294901760
  %1116 = vmatpush1.msra.mxu0 %v1115
  %1117 = vmatprep.subr.mxu0 0.0
  %v1118 = vand.u32 %v25, 4294901760
  %v1119 = vsub.f32 %v25, %v1118
  %v1120 = vand.u32 %v1119, 4294901760
  %1121 = vmatpush1.msra.mxu0 %v1120
  %1122 = vmatprep.subr.mxu0 0.0
  %v1123 = vand.u32 %v24, 4294901760
  %v1124 = vsub.f32 %v24, %v1123
  %v1125 = vand.u32 %v1124, 4294901760
  %1126 = vmatpush1.msra.mxu0 %v1125
  %1127 = vmatprep.subr.mxu0 0.0
  %v1128 = vand.u32 %v23, 4294901760
  %v1129 = vsub.f32 %v23, %v1128
  %v1130 = vand.u32 %v1129, 4294901760
  %1131 = vmatpush1.msra.mxu0 %v1130
  %1132 = vmatprep.subr.mxu0 0.0
  %v1133 = vand.u32 %v22, 4294901760
  %v1134 = vsub.f32 %v22, %v1133
  %v1135 = vand.u32 %v1134, 4294901760
  %1136 = vmatpush1.msra.mxu0 %v1135
  %1137 = vmatprep.subr.mxu0 0.0
  %v1138 = vand.u32 %v21, 4294901760
  %v1139 = vsub.f32 %v21, %v1138
  %v1140 = vand.u32 %v1139, 4294901760
  %1141 = vmatpush1.msra.mxu0 %v1140
  %1142 = vmatprep.subr.mxu0 0.0
  %v1143 = vand.u32 %v20, 4294901760
  %v1144 = vsub.f32 %v20, %v1143
  %v1145 = vand.u32 %v1144, 4294901760
  %1146 = vmatpush1.msra.mxu0 %v1145
  %1147 = vmatprep.subr.mxu0 0.0
  %v1148 = vand.u32 %v19, 4294901760
  %v1149 = vsub.f32 %v19, %v1148
  %v1150 = vand.u32 %v1149, 4294901760
  %1151 = vmatpush1.msra.mxu0 %v1150
  %1152 = vmatprep.subr.mxu0 0.0
  %v1153 = vand.u32 %v18, 4294901760
  %v1154 = vsub.f32 %v18, %v1153
  %v1155 = vand.u32 %v1154, 4294901760
  %1156 = vmatpush1.msra.mxu0 %v1155
  %1157 = vmatprep.subr.mxu0 0.0
  %v1158 = vand.u32 %v17, 4294901760
  %v1159 = vsub.f32 %v17, %v1158
  %v1160 = vand.u32 %v1159, 4294901760
  %1161 = vmatpush1.msra.mxu0 %v1160
  %1162 = vmatprep.subr.mxu0 0.0
  %v1163 = vand.u32 %v16, 4294901760
  %v1164 = vsub.f32 %v16, %v1163
  %v1165 = vand.u32 %v1164, 4294901760
  %1166 = vmatpush1.msra.mxu0 %v1165
  %1167 = vmatprep.subr.mxu0 0.0
  %v1168 = vand.u32 %v15, 4294901760
  %v1169 = vsub.f32 %v15, %v1168
  %v1170 = vand.u32 %v1169, 4294901760
  %1171 = vmatpush1.msra.mxu0 %v1170
  %1172 = vmatprep.subr.mxu0 0.0
  %v1173 = vand.u32 %v14, 4294901760
  %v1174 = vsub.f32 %v14, %v1173
  %v1175 = vand.u32 %v1174, 4294901760
  %1176 = vmatpush1.msra.mxu0 %v1175
  %1177 = vmatprep.subr.mxu0 0.0
  %v1178 = vand.u32 %v13, 4294901760
  %v1179 = vsub.f32 %v13, %v1178
  %v1180 = vand.u32 %v1179, 4294901760
  %1181 = vmatpush1.msra.mxu0 %v1180
  %1182 = vmatprep.subr.mxu0 0.0
  %v1183 = vand.u32 %v12, 4294901760
  %v1184 = vsub.f32 %v12, %v1183
  %v1185 = vand.u32 %v1184, 4294901760
  %1186 = vmatpush1.msra.mxu0 %v1185
  %1187 = vmatprep.subr.mxu0 0.0
  %1188 = vmatpush2.msra.mxu0 0.0
  %1189 = vmatprep.subr.mxu0 0.0
  %1190 = vmatpush2.msra.mxu0 0.0
  %1191 = vmatprep.subr.mxu0 0.0
  %1192 = vmatpush2.msra.mxu0 0.0
  %1193 = vmatprep.subr.mxu0 0.0
  %1194 = vmatpush2.msra.mxu0 0.0
  %1195 = vmatprep.subr.mxu0 0.0
  %1196 = vmatpush2.msra.mxu0 0.0
  %1197 = vmatprep.subr.mxu0 0.0
  %1198 = vmatpush2.msra.mxu0 0.0
  %1199 = vmatprep.subr.mxu0 0.0
  %1200 = vmatpush2.msra.mxu0 0.0
  %1201 = vmatprep.subr.mxu0 0.0
  %1202 = vmatpush2.msra.mxu0 0.0
  %1203 = vmatprep.subr.mxu0 0.0
  %1204 = vmatpush2.msra.mxu0 0.0
  %1205 = vmatprep.subr.mxu0 0.0
  %1206 = vmatpush2.msra.mxu0 0.0
  %1207 = vmatprep.subr.mxu0 0.0
  %1208 = vmatpush2.msra.mxu0 0.0
  %1209 = vmatprep.subr.mxu0 0.0
  %1210 = vmatpush2.msra.mxu0 0.0
  %1211 = vmatprep.subr.mxu0 0.0
  %1212 = vmatpush2.msra.mxu0 0.0
  %1213 = vmatprep.subr.mxu0 0.0
  %1214 = vmatpush2.msra.mxu0 0.0
  %1215 = vmatprep.subr.mxu0 0.0
  %1216 = vmatpush2.msra.mxu0 0.0
  %1217 = vmatprep.subr.mxu0 0.0
  %1218 = vmatpush2.msra.mxu0 0.0
  %1219 = vmatprep.mubr.f32.mxu0 0.0
  %v1220 = vand.u32 %v671, 4294901760
  %1221 = vmatmul.mubr.f32.gmra.mxu0 %v1220
  %v1222 = vpop.f32.mrf.mxu0
  %v1223 = vadd.f32 %v1104, %v1222
  %v1224 = vpop.f32.mrf.mxu0
  %1225 = vdwg.mxu0
  %1226 = vmatprep.subr.mxu0 0.0
  %v1227 = vand.u32 %v27, 4294901760
  %1228 = vmatpush1.msra.mxu0 %v1227
  %1229 = vmatprep.subr.mxu0 0.0
  %v1230 = vand.u32 %v26, 4294901760
  %1231 = vmatpush1.msra.mxu0 %v1230
  %1232 = vmatprep.subr.mxu0 0.0
  %v1233 = vand.u32 %v25, 4294901760
  %1234 = vmatpush1.msra.mxu0 %v1233
  %1235 = vmatprep.subr.mxu0 0.0
  %v1236 = vand.u32 %v24, 4294901760
  %1237 = vmatpush1.msra.mxu0 %v1236
  %1238 = vmatprep.subr.mxu0 0.0
  %v1239 = vand.u32 %v23, 4294901760
  %1240 = vmatpush1.msra.mxu0 %v1239
  %1241 = vmatprep.subr.mxu0 0.0
  %v1242 = vand.u32 %v22, 4294901760
  %1243 = vmatpush1.msra.mxu0 %v1242
  %1244 = vmatprep.subr.mxu0 0.0
  %v1245 = vand.u32 %v21, 4294901760
  %1246 = vmatpush1.msra.mxu0 %v1245
  %1247 = vmatprep.subr.mxu0 0.0
  %v1248 = vand.u32 %v20, 4294901760
  %1249 = vmatpush1.msra.mxu0 %v1248
  %1250 = vmatprep.subr.mxu0 0.0
  %v1251 = vand.u32 %v19, 4294901760
  %1252 = vmatpush1.msra.mxu0 %v1251
  %1253 = vmatprep.subr.mxu0 0.0
  %v1254 = vand.u32 %v18, 4294901760
  %1255 = vmatpush1.msra.mxu0 %v1254
  %1256 = vmatprep.subr.mxu0 0.0
  %v1257 = vand.u32 %v17, 4294901760
  %1258 = vmatpush1.msra.mxu0 %v1257
  %1259 = vmatprep.subr.mxu0 0.0
  %v1260 = vand.u32 %v16, 4294901760
  %1261 = vmatpush1.msra.mxu0 %v1260
  %1262 = vmatprep.subr.mxu0 0.0
  %v1263 = vand.u32 %v15, 4294901760
  %1264 = vmatpush1.msra.mxu0 %v1263
  %1265 = vmatprep.subr.mxu0 0.0
  %v1266 = vand.u32 %v14, 4294901760
  %1267 = vmatpush1.msra.mxu0 %v1266
  %1268 = vmatprep.subr.mxu0 0.0
  %v1269 = vand.u32 %v13, 4294901760
  %1270 = vmatpush1.msra.mxu0 %v1269
  %1271 = vmatprep.subr.mxu0 0.0
  %v1272 = vand.u32 %v12, 4294901760
  %1273 = vmatpush1.msra.mxu0 %v1272
  %1274 = vmatprep.subr.mxu0 0.0
  %1275 = vmatpush2.msra.mxu0 0.0
  %1276 = vmatprep.subr.mxu0 0.0
  %1277 = vmatpush2.msra.mxu0 0.0
  %1278 = vmatprep.subr.mxu0 0.0
  %1279 = vmatpush2.msra.mxu0 0.0
  %1280 = vmatprep.subr.mxu0 0.0
  %1281 = vmatpush2.msra.mxu0 0.0
  %1282 = vmatprep.subr.mxu0 0.0
  %1283 = vmatpush2.msra.mxu0 0.0
  %1284 = vmatprep.subr.mxu0 0.0
  %1285 = vmatpush2.msra.mxu0 0.0
  %1286 = vmatprep.subr.mxu0 0.0
  %1287 = vmatpush2.msra.mxu0 0.0
  %1288 = vmatprep.subr.mxu0 0.0
  %1289 = vmatpush2.msra.mxu0 0.0
  %1290 = vmatprep.subr.mxu0 0.0
  %1291 = vmatpush2.msra.mxu0 0.0
  %1292 = vmatprep.subr.mxu0 0.0
  %1293 = vmatpush2.msra.mxu0 0.0
  %1294 = vmatprep.subr.mxu0 0.0
  %1295 = vmatpush2.msra.mxu0 0.0
  %1296 = vmatprep.subr.mxu0 0.0
  %1297 = vmatpush2.msra.mxu0 0.0
  %1298 = vmatprep.subr.mxu0 0.0
  %1299 = vmatpush2.msra.mxu0 0.0
  %1300 = vmatprep.subr.mxu0 0.0
  %1301 = vmatpush2.msra.mxu0 0.0
  %1302 = vmatprep.subr.mxu0 0.0
  %1303 = vmatpush2.msra.mxu0 0.0
  %1304 = vmatprep.subr.mxu0 0.0
  %1305 = vmatpush2.msra.mxu0 0.0
  %1306 = vmatprep.mubr.f32.mxu0 0.0
  %v1307 = vand.u32 %v671, 4294901760
  %1308 = vmatmul.mubr.f32.gmra.mxu0 %v1307
  %v1309 = vpop.f32.mrf.mxu0
  %v1310 = vadd.f32 %v1223, %v1309
  %v1311 = vpop.f32.mrf.mxu0
  %1312 = vdwg.mxu0
  %v1313 = vmul.f32 %v1310, 0.032258064
  %v1314 = vrsqrt.pop %v1313
  %v1315 = vmul.f32 %v1313, %v1314
  %vm1316 = vcmp.eq.f32.partialorder %v1313, inf
  %v1317 = vsel %vm1316, %v1313, %v1315
  %vm1318 = vcmp.eq.f32.partialorder %v1313, 0.0
  %v1319 = vand.u32 %v1313, 2147483648
  %v1320 = vsel %vm1318, %v1319, %v1317
  %v1321 = vadd.f32 %v1320, 1e-05
  %v1322 = vrcp.pop %v1321
  %v1323 = vmul.f32 %v1321, %v1322
  %v1324 = vsub.f32 2.0, %v1323
  %v1325 = vmul.f32 %v1322, %v1324
  %v1326 = vmul.f32 %v1321, %v1325
  %v1327 = vsub.f32 2.0, %v1326
  %v1328 = vmul.f32 %v1325, %v1327
  %v1329 = vmul.f32 %v670, %v1328
  %v1330 = vmul.f32 %v1329, 0.1
  %v1331 = vsub.f32 1.0, %v1330
  %v1332 = vmul.f32 %v1329, %v1331
  %1333 = vst [vmem:[%s2] sm:$0xff] %v1332
  // Predicated region
  $region10: #{_lambda_.1} parent=0 // pred_check
    _
  $region11: #{_lambda_.1} parent=0 // pred_check_branch
    %1335 = sbr.rel (0) target = $region13
  $region12: #{_lambda_.1} parent=0 // pred_region
    _
  $region13: #{_lambda_.1} parent=0 // pred_fallthru
    _
  // Predicated region
  $region14: #{_lambda_.1} parent=0 // pred_check
    _
  $region15: #{_lambda_.1} parent=0 // pred_check_branch
    %1337 = sbr.rel (0) target = $region17
  $region16: #{_lambda_.1} parent=0 // pred_region
    _
  $region17: #{_lambda_.1} parent=0 // pred_fallthru
    _

</llo_original>
